<compile_context>
chip_gen: v7x
topology: tpu7x:2x2x1
jax: 0.10.0
libtpu: 0.0.40
codegen_flags: <defaults>
</compile_context>

<pallas_src>
import math
import numpy as np
import jax
import jax.numpy as jnp
from jax.experimental import pallas as pl
from jax.experimental.pallas import tpu as pltpu

# ---- module hyperparams (small, consistent with the PyTorch module) ----
HIDDEN = 32
NUM_HEADS = 4
HEAD_DIM = HIDDEN // NUM_HEADS
NUM_GQA_GROUPS = NUM_HEADS              # default: num_gqa_groups = num_attention_heads
KV_DIM = HEAD_DIM * NUM_GQA_GROUPS      # == HIDDEN here
SEQ = 8
BATCH = 2
TOKENS = SEQ * BATCH                    # 16 rows, ordered (s, b)
ROWS = BATCH * NUM_HEADS * SEQ          # 64 flattened attention rows, ordered (h, s, b)
LN_EPS = 1e-5
TRUNC_STD = 0.02                        # DEFAULT_TRUNC_STD

_VMEM = pl.BlockSpec(memory_space=pltpu.MemorySpace.VMEM)


# ----------------------------- fused Pallas kernel -----------------------------

def fused_mha_kernel(x_ref, lnw_ref, lnb_ref, wqkv_ref, bqkv_ref, wp_ref, bp_ref, o_ref):
    """LayerNorm -> fused QKV projection -> masked batched SDPA -> output projection.

    x_ref:    [TOKENS, HIDDEN]           token rows ordered row = s*B + b  (native sbhd flatten)
    wqkv_ref: [HIDDEN, HIDDEN+2*KV_DIM]  pre-transposed [in,out]; 1/sqrt(D) folded into q cols
    bqkv_ref: [1, HIDDEN+2*KV_DIM]
    wp_ref:   [HIDDEN, HIDDEN]           pre-transposed [in,out]
    bp_ref:   [1, HIDDEN]
    o_ref:    [TOKENS, HIDDEN]
    """
    # -- LayerNorm --
    x = x_ref[...].astype(jnp.float32)
    mean = jnp.mean(x, axis=-1, keepdims=True)
    var = jnp.mean((x - mean) ** 2, axis=-1, keepdims=True)
    xn = (x - mean) * jax.lax.rsqrt(var + LN_EPS)
    xn = xn * lnw_ref[...] + lnb_ref[...]

    # -- Single MXU pass for q, k, v: [TOKENS, 3*HIDDEN] --
    qkv = jnp.dot(xn, wqkv_ref[...], preferred_element_type=jnp.float32) + bqkv_ref[...]

    # -- Head/group flatten (one relayout per tensor, shared across both batches) --
    #    rows ordered (h, s, b) for q and (g, s_k, b) for k/v -> batch id of any row/col is idx % B.
    qf = jnp.concatenate(
        [qkv[:, h * HEAD_DIM:(h + 1) * HEAD_DIM] for h in range(NUM_HEADS)], axis=0)
    kf = jnp.concatenate(
        [qkv[:, HIDDEN + g * HEAD_DIM:HIDDEN + (g + 1) * HEAD_DIM]
         for g in range(NUM_GQA_GROUPS)], axis=0)
    vf = jnp.concatenate(
        [qkv[:, HIDDEN + KV_DIM + g * HEAD_DIM:HIDDEN + KV_DIM + (g + 1) * HEAD_DIM]
         for g in range(NUM_GQA_GROUPS)], axis=0)                     # each [ROWS, HEAD_DIM]

    # -- One masked score matmul for both batches (contract on d, no explicit K transpose).
    #    Scale already folded into q.  Every query head attends to the concatenation of all
    #    groups' K/V of its own batch (h=1 broadcast), matching 'b h (g s) d'; the K/V column
    #    ordering is softmax/PV-invariant as long as K and V use the same ordering.
    s = jax.lax.dot_general(qf, kf, (((1,), (1,)), ((), ())),
                            preferred_element_type=jnp.float32)       # [ROWS, ROWS]
    rb = jax.lax.broadcasted_iota(jnp.int32, (ROWS, ROWS), 0) % BATCH
    cb = jax.lax.broadcasted_iota(jnp.int32, (ROWS, ROWS), 1) % BATCH
    s = jnp.where(rb == cb, s, -1e30)    # off-batch scores -> exp() == 0 exactly

    # -- One softmax + one PV matmul --
    m = jnp.max(s, axis=-1, keepdims=True)
    p = jnp.exp(s - m)
    l = jnp.sum(p, axis=-1, keepdims=True)                            # >= 1 (32 valid keys/row)
    ob = jnp.dot(p, vf, preferred_element_type=jnp.float32)           # [ROWS, HEAD_DIM]
    ob = ob * pl.reciprocal(l, approx=True)                           # EUP vrcp, VALU stays free

    # -- 'b h s d -> s b (h d)': rows back to (s, b), heads back onto lanes --
    o2 = jnp.concatenate(
        [ob[h * TOKENS:(h + 1) * TOKENS, :] for h in range(NUM_HEADS)], axis=1)  # [TOKENS, HIDDEN]

    # -- Output projection (the only HBM write) --
    y = jnp.dot(o2, wp_ref[...], preferred_element_type=jnp.float32) + bp_ref[...]
    o_ref[...] = y.astype(o_ref.dtype)


# ------------------------------- wrappers ----------------------------------

def fuse_params(params):
    """One-time weight preprocessing: transpose to [in,out], concat QKV, fold 1/sqrt(D) into q.

    Done once at init (NOT per forward call) so the jitted forward launches nothing but the
    fused Pallas kernel plus two free reshapes.
    """
    scale = 1.0 / math.sqrt(HEAD_DIM)
    wqkv = jnp.concatenate(
        [params["q_w"].T * scale, params["k_w"].T, params["v_w"].T], axis=1)   # [H, H+2*KV]
    bqkv = jnp.concatenate(
        [params["q_b"] * scale, params["k_b"], params["v_b"]]).reshape(1, -1)  # [1, H+2*KV]
    return {
        "lnw": params["ln_w"].reshape(1, HIDDEN),
        "lnb": params["ln_b"].reshape(1, HIDDEN),
        "wqkv": wqkv,
        "bqkv": bqkv,
        "wp": params["proj_w"].T,                                              # [H, H]
        "bp": params["proj_b"].reshape(1, HIDDEN),
    }


@jax.jit
def multihead_attention(x, fused):
    """x: [S, B, HIDDEN] (sbhd). Returns [S, B, HIDDEN]."""
    S, B, H = x.shape
    x_flat = x.reshape(S * B, H)     # native (s, b) row order: pure reshape, no transpose op
    y = pl.pallas_call(
        fused_mha_kernel,
        out_shape=jax.ShapeDtypeStruct((S * B, H), x.dtype),
        in_specs=[_VMEM] * 7,
        out_specs=_VMEM,
    )(x_flat, fused["lnw"], fused["lnb"], fused["wqkv"], fused["bqkv"],
      fused["wp"], fused["bp"])
    return y.reshape(S, B, H)        # still (s, b) order -> free reshape back to sbhd


# ------------------------- pure-JAX reference ------------------------------

def reference(x, params):
    S, B, H = x.shape
    xf = x.astype(jnp.float32)
    mean = xf.mean(-1, keepdims=True)
    var = ((xf - mean) ** 2).mean(-1, keepdims=True)
    xn = (xf - mean) * jax.lax.rsqrt(var + LN_EPS) * params["ln_w"] + params["ln_b"]
    q2 = xn @ params["q_w"].T + params["q_b"]
    k2 = xn @ params["k_w"].T + params["k_b"]
    v2 = xn @ params["v_w"].T + params["v_b"]
    q = q2.reshape(S, B, NUM_HEADS, HEAD_DIM).transpose(1, 2, 0, 3)
    def to_kv(t):
        t = t.reshape(S, B, NUM_GQA_GROUPS, 1, HEAD_DIM).transpose(1, 3, 2, 0, 4)
        return t.reshape(B, 1, NUM_GQA_GROUPS * S, HEAD_DIM)
    k, v = to_kv(k2), to_kv(v2)
    scale = 1.0 / math.sqrt(HEAD_DIM)
    s = jnp.einsum("bhqd,bgkd->bhqk", q, k) * scale       # g==1 broadcasts over heads
    p = jax.nn.softmax(s, axis=-1)
    o = jnp.einsum("bhqk,bgkd->bhqd", p, v)
    o = o.transpose(2, 0, 1, 3).reshape(S, B, HIDDEN)
    return o @ params["proj_w"].T + params["proj_b"]


# --------------------------------- main ------------------------------------

def _trunc_normal(key, shape, std):
    return jax.random.truncated_normal(key, -2.0, 2.0, shape, jnp.float32) * std


def init_params(key):
    ks = jax.random.split(key, 6)
    bound = 1.0 / math.sqrt(HIDDEN)
    return {
        "ln_w": jnp.ones((HIDDEN,), jnp.float32),
        "ln_b": jnp.zeros((HIDDEN,), jnp.float32),
        "q_w": _trunc_normal(ks[0], (HIDDEN, HIDDEN), TRUNC_STD),
        "k_w": _trunc_normal(ks[1], (KV_DIM, HIDDEN), TRUNC_STD),
        "v_w": _trunc_normal(ks[2], (KV_DIM, HIDDEN), TRUNC_STD),
        "q_b": jnp.zeros((HIDDEN,), jnp.float32),
        "k_b": jnp.zeros((KV_DIM,), jnp.float32),
        "v_b": jnp.zeros((KV_DIM,), jnp.float32),
        # nn.Linear default (kaiming-uniform-ish), deterministic
        "proj_w": jax.random.uniform(ks[3], (HIDDEN, HIDDEN), jnp.float32, -bound, bound),
        "proj_b": jax.random.uniform(ks[4], (HIDDEN,), jnp.float32, -bound, bound),
    }


if __name__ == "__main__":
    key = jax.random.PRNGKey(0)
    pkey, xkey = jax.random.split(key)
    params = init_params(pkey)
    fused = jax.block_until_ready(fuse_params(params))   # one-time weight fusion, not per-call

    # layout: sbhd -> [S, B, HIDDEN]
    x = jax.random.normal(xkey, (SEQ, BATCH, HIDDEN), jnp.float32)

    out = multihead_attention(x, fused)
    out = jax.block_until_ready(out)

    ref = jax.block_until_ready(reference(x, params))
    assert out.shape == (SEQ, BATCH, HIDDEN), out.shape
    # atol slightly above 1e-4 to allow the EUP approximate reciprocal in the softmax.
    np.testing.assert_allclose(np.asarray(out), np.asarray(ref), rtol=1e-4, atol=2e-4)
    print("KERNEL_OK")
</pallas_src>

<mosaic_0001>
module attributes {stable_mosaic.version = 11 : i64} {
  func.func @fused_mha_kernel(%arg0: memref<16x32xf32, #tpu.memory_space<vmem>>, %arg1: memref<1x32xf32, #tpu.memory_space<vmem>>, %arg2: memref<1x32xf32, #tpu.memory_space<vmem>>, %arg3: memref<32x96xf32, #tpu.memory_space<vmem>>, %arg4: memref<1x96xf32, #tpu.memory_space<vmem>>, %arg5: memref<32x32xf32, #tpu.memory_space<vmem>>, %arg6: memref<1x32xf32, #tpu.memory_space<vmem>>, %arg7: memref<16x32xf32, #tpu.memory_space<vmem>>) attributes {dimension_semantics = [], scalar_prefetch = 0 : i64, scratch_operands = 0 : i64, tpu.core_type = #tpu.core_type<tc>} {
    %c0 = arith.constant 0 : index
    %c0_0 = arith.constant 0 : index
    %0 = vector.load %arg0[%c0, %c0_0] : memref<16x32xf32, #tpu.memory_space<vmem>>, vector<16x32xf32>
    %cst = arith.constant dense<0.000000e+00> : vector<16xf32>
    %1 = vector.multi_reduction <add>, %0, %cst [1] : vector<16x32xf32> to vector<16xf32>
    %2 = vector.shape_cast %1 : vector<16xf32> to vector<16x1xf32>
    %cst_1 = arith.constant 3.200000e+01 : f32
    %3 = vector.broadcast %cst_1 : f32 to vector<16x1xf32>
    %4 = arith.divf %2, %3 : vector<16x1xf32>
    %5 = vector.broadcast %4 : vector<16x1xf32> to vector<16x32xf32>
    %6 = arith.subf %0, %5 : vector<16x32xf32>
    %7 = arith.mulf %6, %6 : vector<16x32xf32>
    %cst_2 = arith.constant dense<0.000000e+00> : vector<16xf32>
    %8 = vector.multi_reduction <add>, %7, %cst_2 [1] : vector<16x32xf32> to vector<16xf32>
    %9 = vector.shape_cast %8 : vector<16xf32> to vector<16x1xf32>
    %cst_3 = arith.constant 3.200000e+01 : f32
    %10 = vector.broadcast %cst_3 : f32 to vector<16x1xf32>
    %11 = arith.divf %9, %10 : vector<16x1xf32>
    %12 = vector.broadcast %4 : vector<16x1xf32> to vector<16x32xf32>
    %13 = arith.subf %0, %12 : vector<16x32xf32>
    %cst_4 = arith.constant 9.99999974E-6 : f32
    %14 = vector.broadcast %cst_4 : f32 to vector<16x1xf32>
    %15 = arith.addf %11, %14 : vector<16x1xf32>
    %16 = math.rsqrt %15 : vector<16x1xf32>
    %17 = vector.broadcast %16 : vector<16x1xf32> to vector<16x32xf32>
    %18 = arith.mulf %13, %17 : vector<16x32xf32>
    %c0_5 = arith.constant 0 : index
    %c0_6 = arith.constant 0 : index
    %19 = vector.load %arg1[%c0_5, %c0_6] : memref<1x32xf32, #tpu.memory_space<vmem>>, vector<1x32xf32>
    %20 = vector.broadcast %19 : vector<1x32xf32> to vector<16x32xf32>
    %21 = arith.mulf %18, %20 : vector<16x32xf32>
    %c0_7 = arith.constant 0 : index
    %c0_8 = arith.constant 0 : index
    %22 = vector.load %arg2[%c0_7, %c0_8] : memref<1x32xf32, #tpu.memory_space<vmem>>, vector<1x32xf32>
    %23 = vector.broadcast %22 : vector<1x32xf32> to vector<16x32xf32>
    %24 = arith.addf %21, %23 : vector<16x32xf32>
    %c0_9 = arith.constant 0 : index
    %c0_10 = arith.constant 0 : index
    %25 = vector.load %arg3[%c0_9, %c0_10] : memref<32x96xf32, #tpu.memory_space<vmem>>, vector<32x96xf32>
    %cst_11 = arith.constant dense<0.000000e+00> : vector<16x96xf32>
    %26 = tpu.matmul %24, %25, %cst_11 {dimension_numbers = #tpu.dot_dimension_numbers<[1], [0], [0], [1], [0, 0, 1, 1], [], []>} : vector<16x32xf32>, vector<32x96xf32>, vector<16x96xf32> -> vector<16x96xf32>
    %c0_12 = arith.constant 0 : index
    %c0_13 = arith.constant 0 : index
    %27 = vector.load %arg4[%c0_12, %c0_13] : memref<1x96xf32, #tpu.memory_space<vmem>>, vector<1x96xf32>
    %28 = vector.broadcast %27 : vector<1x96xf32> to vector<16x96xf32>
    %29 = arith.addf %26, %28 : vector<16x96xf32>
    %30 = vector.extract_strided_slice %29 {offsets = [0, 0], sizes = [16, 8], strides = [1, 1]} : vector<16x96xf32> to vector<16x8xf32>
    %31 = vector.extract_strided_slice %29 {offsets = [0, 8], sizes = [16, 8], strides = [1, 1]} : vector<16x96xf32> to vector<16x8xf32>
    %32 = vector.extract_strided_slice %29 {offsets = [0, 16], sizes = [16, 8], strides = [1, 1]} : vector<16x96xf32> to vector<16x8xf32>
    %33 = vector.extract_strided_slice %29 {offsets = [0, 24], sizes = [16, 8], strides = [1, 1]} : vector<16x96xf32> to vector<16x8xf32>
    %34 = tpu.concatenate %30, %31, %32, %33 in 0 : vector<16x8xf32>, vector<16x8xf32>, vector<16x8xf32>, vector<16x8xf32> -> vector<64x8xf32>
    %35 = vector.extract_strided_slice %29 {offsets = [0, 32], sizes = [16, 8], strides = [1, 1]} : vector<16x96xf32> to vector<16x8xf32>
    %36 = vector.extract_strided_slice %29 {offsets = [0, 40], sizes = [16, 8], strides = [1, 1]} : vector<16x96xf32> to vector<16x8xf32>
    %37 = vector.extract_strided_slice %29 {offsets = [0, 48], sizes = [16, 8], strides = [1, 1]} : vector<16x96xf32> to vector<16x8xf32>
    %38 = vector.extract_strided_slice %29 {offsets = [0, 56], sizes = [16, 8], strides = [1, 1]} : vector<16x96xf32> to vector<16x8xf32>
    %39 = tpu.concatenate %35, %36, %37, %38 in 0 : vector<16x8xf32>, vector<16x8xf32>, vector<16x8xf32>, vector<16x8xf32> -> vector<64x8xf32>
    %40 = vector.extract_strided_slice %29 {offsets = [0, 64], sizes = [16, 8], strides = [1, 1]} : vector<16x96xf32> to vector<16x8xf32>
    %41 = vector.extract_strided_slice %29 {offsets = [0, 72], sizes = [16, 8], strides = [1, 1]} : vector<16x96xf32> to vector<16x8xf32>
    %42 = vector.extract_strided_slice %29 {offsets = [0, 80], sizes = [16, 8], strides = [1, 1]} : vector<16x96xf32> to vector<16x8xf32>
    %43 = vector.extract_strided_slice %29 {offsets = [0, 88], sizes = [16, 8], strides = [1, 1]} : vector<16x96xf32> to vector<16x8xf32>
    %44 = tpu.concatenate %40, %41, %42, %43 in 0 : vector<16x8xf32>, vector<16x8xf32>, vector<16x8xf32>, vector<16x8xf32> -> vector<64x8xf32>
    %cst_14 = arith.constant dense<0.000000e+00> : vector<64x64xf32>
    %45 = tpu.matmul %34, %39, %cst_14 {dimension_numbers = #tpu.dot_dimension_numbers<[1], [1], [0], [0], [0, 0, 1, 0], [], []>} : vector<64x8xf32>, vector<64x8xf32>, vector<64x64xf32> -> vector<64x64xf32>
    %46 = tpu.iota {dimensions = array<i32: 0>} : vector<64x64xi32>
    %c2_i32 = arith.constant 2 : i32
    %c0_i32 = arith.constant 0 : i32
    %47 = arith.cmpi eq, %c2_i32, %c0_i32 : i32
    %c1_i32 = arith.constant 1 : i32
    %48 = arith.select %47, %c1_i32, %c2_i32 : i32
    %49 = vector.broadcast %48 : i32 to vector<64x64xi32>
    %50 = arith.remsi %46, %49 : vector<64x64xi32>
    %c0_i32_15 = arith.constant 0 : i32
    %51 = vector.broadcast %c0_i32_15 : i32 to vector<64x64xi32>
    %52 = arith.cmpi ne, %50, %51 : vector<64x64xi32>
    %c0_i32_16 = arith.constant 0 : i32
    %53 = vector.broadcast %c0_i32_16 : i32 to vector<64x64xi32>
    %54 = arith.cmpi slt, %50, %53 : vector<64x64xi32>
    %c0_i32_17 = arith.constant 0 : i32
    %55 = arith.cmpi slt, %48, %c0_i32_17 : i32
    %56 = vector.broadcast %55 : i1 to vector<64x64xi1>
    %57 = vector.broadcast %56 : vector<64x64xi1> to vector<64x64xi1>
    %58 = arith.xori %54, %57 : vector<64x64xi1>
    %59 = arith.andi %58, %52 : vector<64x64xi1>
    %60 = vector.broadcast %48 : i32 to vector<64x64xi32>
    %61 = arith.addi %50, %60 : vector<64x64xi32>
    %62 = arith.select %59, %61, %50 : vector<64x64xi1>, vector<64x64xi32>
    %63 = tpu.iota {dimensions = array<i32: 1>} : vector<64x64xi32>
    %c2_i32_18 = arith.constant 2 : i32
    %c0_i32_19 = arith.constant 0 : i32
    %64 = arith.cmpi eq, %c2_i32_18, %c0_i32_19 : i32
    %c1_i32_20 = arith.constant 1 : i32
    %65 = arith.select %64, %c1_i32_20, %c2_i32_18 : i32
    %66 = vector.broadcast %65 : i32 to vector<64x64xi32>
    %67 = arith.remsi %63, %66 : vector<64x64xi32>
    %c0_i32_21 = arith.constant 0 : i32
    %68 = vector.broadcast %c0_i32_21 : i32 to vector<64x64xi32>
    %69 = arith.cmpi ne, %67, %68 : vector<64x64xi32>
    %c0_i32_22 = arith.constant 0 : i32
    %70 = vector.broadcast %c0_i32_22 : i32 to vector<64x64xi32>
    %71 = arith.cmpi slt, %67, %70 : vector<64x64xi32>
    %c0_i32_23 = arith.constant 0 : i32
    %72 = arith.cmpi slt, %65, %c0_i32_23 : i32
    %73 = vector.broadcast %72 : i1 to vector<64x64xi1>
    %74 = vector.broadcast %73 : vector<64x64xi1> to vector<64x64xi1>
    %75 = arith.xori %71, %74 : vector<64x64xi1>
    %76 = arith.andi %75, %69 : vector<64x64xi1>
    %77 = vector.broadcast %65 : i32 to vector<64x64xi32>
    %78 = arith.addi %67, %77 : vector<64x64xi32>
    %79 = arith.select %76, %78, %67 : vector<64x64xi1>, vector<64x64xi32>
    %80 = arith.cmpi eq, %62, %79 : vector<64x64xi32>
    %cst_24 = arith.constant -1.000000e+30 : f32
    %81 = vector.broadcast %cst_24 : f32 to vector<64x64xf32>
    %82 = arith.select %80, %45, %81 : vector<64x64xi1>, vector<64x64xf32>
    %cst_25 = arith.constant dense<0xFF800000> : vector<64xf32>
    %83 = vector.multi_reduction <maximumf>, %82, %cst_25 [1] : vector<64x64xf32> to vector<64xf32>
    %84 = vector.shape_cast %83 : vector<64xf32> to vector<64x1xf32>
    %85 = vector.broadcast %84 : vector<64x1xf32> to vector<64x64xf32>
    %86 = arith.subf %82, %85 : vector<64x64xf32>
    %87 = math.exp %86 : vector<64x64xf32>
    %cst_26 = arith.constant dense<0.000000e+00> : vector<64xf32>
    %88 = vector.multi_reduction <add>, %87, %cst_26 [1] : vector<64x64xf32> to vector<64xf32>
    %89 = vector.shape_cast %88 : vector<64xf32> to vector<64x1xf32>
    %cst_27 = arith.constant dense<0.000000e+00> : vector<64x8xf32>
    %90 = tpu.matmul %87, %44, %cst_27 {dimension_numbers = #tpu.dot_dimension_numbers<[1], [0], [0], [1], [0, 0, 1, 1], [], []>} : vector<64x64xf32>, vector<64x8xf32>, vector<64x8xf32> -> vector<64x8xf32>
    %91 = tpu.reciprocal %89 {approx = true} : vector<64x1xf32> -> vector<64x1xf32>
    %92 = vector.broadcast %91 : vector<64x1xf32> to vector<64x8xf32>
    %93 = arith.mulf %90, %92 : vector<64x8xf32>
    %94 = vector.extract_strided_slice %93 {offsets = [0, 0], sizes = [16, 8], strides = [1, 1]} : vector<64x8xf32> to vector<16x8xf32>
    %95 = vector.extract_strided_slice %93 {offsets = [16, 0], sizes = [16, 8], strides = [1, 1]} : vector<64x8xf32> to vector<16x8xf32>
    %96 = vector.extract_strided_slice %93 {offsets = [32, 0], sizes = [16, 8], strides = [1, 1]} : vector<64x8xf32> to vector<16x8xf32>
    %97 = vector.extract_strided_slice %93 {offsets = [48, 0], sizes = [16, 8], strides = [1, 1]} : vector<64x8xf32> to vector<16x8xf32>
    %98 = tpu.concatenate %94, %95, %96, %97 in 1 : vector<16x8xf32>, vector<16x8xf32>, vector<16x8xf32>, vector<16x8xf32> -> vector<16x32xf32>
    %c0_28 = arith.constant 0 : index
    %c0_29 = arith.constant 0 : index
    %99 = vector.load %arg5[%c0_28, %c0_29] : memref<32x32xf32, #tpu.memory_space<vmem>>, vector<32x32xf32>
    %cst_30 = arith.constant dense<0.000000e+00> : vector<16x32xf32>
    %100 = tpu.matmul %98, %99, %cst_30 {dimension_numbers = #tpu.dot_dimension_numbers<[1], [0], [0], [1], [0, 0, 1, 1], [], []>} : vector<16x32xf32>, vector<32x32xf32>, vector<16x32xf32> -> vector<16x32xf32>
    %c0_31 = arith.constant 0 : index
    %c0_32 = arith.constant 0 : index
    %101 = vector.load %arg6[%c0_31, %c0_32] : memref<1x32xf32, #tpu.memory_space<vmem>>, vector<1x32xf32>
    %102 = vector.broadcast %101 : vector<1x32xf32> to vector<16x32xf32>
    %103 = arith.addf %100, %102 : vector<16x32xf32>
    %c0_33 = arith.constant 0 : index
    %c0_34 = arith.constant 0 : index
    %104 = vector.load %arg7[%c0_33, %c0_34] : memref<16x32xf32, #tpu.memory_space<vmem>>, vector<16x32xf32>
    tpu.vector_store %arg7[%c0_33, %c0_34], %103 {strides = array<i32>} : memref<16x32xf32, #tpu.memory_space<vmem>>, vector<16x32xf32>,
    return
  }
}

</mosaic_0001>

<llo_original>
// kernel: multihead_attention.1
$region0: #{multihead_attention.1}
  #allocation0 [shape = 'u32[]', space=smem, size = 0x4, offset = 0x4, fixed_abs, tag = 'smem constant byte address 0x4 - core index']
  #allocation1 [shape = 'u32[144,128]{1,0:T(1,128)}', space=vmem, size = 0x12000, scoped, tag = 'internal scratch']
  %s0 = inlined_call_operand.hbm [shape: f32[16,32], index: 0, kind: input, shape index: {}]
  %s1 = inlined_call_operand.vmem [shape: f32[1,32], index: 1, kind: input, shape index: {}]
  %s2 = inlined_call_operand.vmem [shape: f32[1,32], index: 2, kind: input, shape index: {}]
  %s3 = inlined_call_operand.hbm [shape: f32[32,96], index: 3, kind: input, shape index: {}]
  %s4 = inlined_call_operand.vmem [shape: f32[1,96], index: 4, kind: input, shape index: {}]
  %s5 = inlined_call_operand.hbm [shape: f32[32,32], index: 5, kind: input, shape index: {}]
  %s6 = inlined_call_operand.vmem [shape: f32[1,32], index: 6, kind: input, shape index: {}]
  %s7 = inlined_call_operand.hbm [shape: f32[16,32], index: 7, kind: output, shape index: {}]
  %s8 = sld [smem:[#allocation0]]
  $region50: #{multihead_attention.1} parent=0
    _
  %s10 = ssub.s32 1, %s8
  %s11 = scalar_select 0, %s10, %s8
  $region1: #{multihead_attention.1} parent=0
    #allocation2 [shape = 'u8[8192]{0}', space=vmem, size = 0x2000, scoped, tag = 'input window, operand 0, single buffered']
    #allocation3 [shape = 's32[1]{0}', space=sflag, size = 0x4, scoped, tag = 'scoped memory for multihead_attention.1']
    #allocation4 [shape = 's32[1]{0}', space=sflag, size = 0x4, scoped, tag = 'scoped memory for multihead_attention.1']
    #allocation5 [shape = 'u8[16384]{0}', space=vmem, size = 0x4000, scoped, tag = 'input window, operand 3, single buffered']
    #allocation6 [shape = 's32[1]{0}', space=sflag, size = 0x4, scoped, tag = 'scoped memory for multihead_attention.1']
    #allocation7 [shape = 'u8[16384]{0}', space=vmem, size = 0x4000, scoped, tag = 'input window, operand 5, single buffered']
    #allocation8 [shape = 'u8[8192]{0}', space=vmem, size = 0x2000, scoped, tag = 'output window, operand 0, single buffered']
    %12 = vsyncpa [#allocation3], 0
    %13 = vsyncpa [#allocation6], 0
    %14 = vsyncpa [#allocation4], 0
    // Predicated region
    $region2: #{multihead_attention.1} parent=1 // pred_check
      _
    $region3: #{multihead_attention.1} parent=1 // pred_check_branch
      %16 = sbr.rel (0) target = $region5
    $region4: #{multihead_attention.1} parent=1 // pred_region
      %s18 = ssub.s32 256, 256
      %19 = vsyncadd [#allocation3], %s18
      %s20 = sshll.u32 [#allocation2], 4
      %s21 = int_to_ptr.vmem [resolvable:$true] %s20
      %26 = dma.hbm_to_vmem [thread:$0]  %s0, 256, %s21, [#allocation3], 128, 128, 8
    $region5: #{multihead_attention.1} parent=1 // pred_fallthru
      _
    // Predicated region
    $region6: #{multihead_attention.1} parent=1 // pred_check
      _
    $region7: #{multihead_attention.1} parent=1 // pred_check_branch
      %28 = sbr.rel (0) target = $region9
    $region8: #{multihead_attention.1} parent=1 // pred_region
      _
    $region9: #{multihead_attention.1} parent=1 // pred_fallthru
      _
    // Predicated region
    $region10: #{multihead_attention.1} parent=1 // pred_check
      _
    $region11: #{multihead_attention.1} parent=1 // pred_check_branch
      %30 = sbr.rel (0) target = $region13
    $region12: #{multihead_attention.1} parent=1 // pred_region
      _
    $region13: #{multihead_attention.1} parent=1 // pred_fallthru
      _
    // Predicated region
    $region14: #{multihead_attention.1} parent=1 // pred_check
      _
    $region15: #{multihead_attention.1} parent=1 // pred_check_branch
      %32 = sbr.rel (0) target = $region17
    $region16: #{multihead_attention.1} parent=1 // pred_region
      %s34 = ssub.s32 512, 512
      %35 = vsyncadd [#allocation6], %s34
      %s36 = sshll.u32 [#allocation5], 4
      %s37 = int_to_ptr.vmem [resolvable:$true] %s36
      %42 = dma.hbm_to_vmem [thread:$0]  %s3, 512, %s37, [#allocation6], 128, 128, 8
    $region17: #{multihead_attention.1} parent=1 // pred_fallthru
      _
    // Predicated region
    $region18: #{multihead_attention.1} parent=1 // pred_check
      _
    $region19: #{multihead_attention.1} parent=1 // pred_check_branch
      %44 = sbr.rel (0) target = $region21
    $region20: #{multihead_attention.1} parent=1 // pred_region
      _
    $region21: #{multihead_attention.1} parent=1 // pred_fallthru
      _
    // Predicated region
    $region22: #{multihead_attention.1} parent=1 // pred_check
      _
    $region23: #{multihead_attention.1} parent=1 // pred_check_branch
      %46 = sbr.rel (0) target = $region25
    $region24: #{multihead_attention.1} parent=1 // pred_region
      %s48 = ssub.s32 512, 512
      %49 = vsyncadd [#allocation6], %s48
      %s50 = sshll.u32 [#allocation7], 4
      %s51 = int_to_ptr.vmem [resolvable:$true] %s50
      %56 = dma.hbm_to_vmem [thread:$0]  %s5, 512, %s51, [#allocation6], 128, 128, 8
    $region25: #{multihead_attention.1} parent=1 // pred_fallthru
      _
    // Predicated region
    $region26: #{multihead_attention.1} parent=1 // pred_check
      _
    $region27: #{multihead_attention.1} parent=1 // pred_check_branch
      %58 = sbr.rel (0) target = $region29
    $region28: #{multihead_attention.1} parent=1 // pred_region
      _
    $region29: #{multihead_attention.1} parent=1 // pred_fallthru
      _
    // Predicated region
    $region30: #{multihead_attention.1} parent=1 // pred_check
      _
    $region31: #{multihead_attention.1} parent=1 // pred_check_branch
      %60 = sbr.rel (0) target = $region33
    $region32: #{multihead_attention.1} parent=1 // pred_region
      %61 = dma.done [#allocation3], 256
    $region33: #{multihead_attention.1} parent=1 // pred_fallthru
      _
    // Predicated region
    $region34: #{multihead_attention.1} parent=1 // pred_check
      _
    $region35: #{multihead_attention.1} parent=1 // pred_check_branch
      %63 = sbr.rel (0) target = $region37
    $region36: #{multihead_attention.1} parent=1 // pred_region
      %64 = dma.done [#allocation6], 512
    $region37: #{multihead_attention.1} parent=1 // pred_fallthru
      _
    // Predicated region
    $region38: #{multihead_attention.1} parent=1 // pred_check
      _
    $region39: #{multihead_attention.1} parent=1 // pred_check_branch
      %66 = sbr.rel (0) target = $region41
    $region40: #{multihead_attention.1} parent=1 // pred_region
      %67 = dma.done [#allocation6], 512
    $region41: #{multihead_attention.1} parent=1 // pred_fallthru
      _
    %v68 = vld [vmem:[#allocation2] sm:$0xff]
    %v69 = vld [vmem:[#allocation2 + $0x8] sm:$0xff]
    %vm70 = vcmask 261120
    %v71 = vsel %vm70, %v68, 0.0
    %72 = vadd.xlane.f32.xlu0 %v71
    %v73 = vpop.xlane.xlu0 %72
    %v74 = vsel %vm70, %v69, 0.0
    %75 = vadd.xlane.f32.xlu0 %v74
    %v76 = vpop.xlane.xlu0 %75
    %v77 = vrcp.pop 32.0
    %v78 = vmul.f32 %v73, %v77
    %v79 = vmul.f32 %v76, %v77
    %v80 = vsub.f32 %v68, %v78
    %v81 = vsub.f32 %v69, %v79
    %v82 = vmul.f32 %v80, %v80
    %v83 = vmul.f32 %v81, %v81
    %v84 = vsel %vm70, %v82, 0.0
    %85 = vadd.xlane.f32.xlu0 %v84
    %v86 = vpop.xlane.xlu0 %85
    %v87 = vsel %vm70, %v83, 0.0
    %88 = vadd.xlane.f32.xlu0 %v87
    %v89 = vpop.xlane.xlu0 %88
    %v90 = vmul.f32 %v86, %v77
    %v91 = vmul.f32 %v89, %v77
    %v92 = vadd.f32 %v90, 1e-05
    %v93 = vadd.f32 %v91, 1e-05
    %v94 = vrsqrt.pop %v92
    %v95 = vrsqrt.pop %v93
    %v96 = vmul.f32 %v80, %v94
    %v97 = vmul.f32 %v81, %v95
    %v98 = vld [vmem:[%s1] sm:$0x1]
    %v100 = vlaneseq
    %v101 = vshrl.u32 %v100, 7
    %v102 = vsub.s32 0, %v101
    %v103 = vrot.slane %v98, %v102
    %v105 = vmul.f32 %v96, %v103
    %v106 = vmul.f32 %v97, %v103
    %v107 = vld [vmem:[%s2] sm:$0x1]
    %v109 = vlaneseq
    %v110 = vshrl.u32 %v109, 7
    %v111 = vsub.s32 0, %v110
    %v112 = vrot.slane %v107, %v111
    %v114 = vadd.f32 %v105, %v112
    %v115 = vadd.f32 %v106, %v112
    %v116 = vld [vmem:[#allocation5] sm:$0xff]
    %v117 = vld [vmem:[#allocation5 + $0x8] sm:$0xff]
    %v118 = vld [vmem:[#allocation5 + $0x10] sm:$0xff]
    %v119 = vld [vmem:[#allocation5 + $0x18] sm:$0xff]
    %v120 = vld [vmem:[%s4] sm:$0x1]
    %v122 = vlaneseq
    %v123 = vshrl.u32 %v122, 7
    %v124 = vsub.s32 0, %v123
    %v125 = vrot.slane %v120, %v124
    %v128 = vsel %vm70, %v114, 0
    %v131 = vsel %vm70, %v115, 0
    %133 = vmatprep.subr.mxu0 0.0
    %134 = vmatpush1.msra.mxu0 %v116
    %135 = vmatprep.subr.mxu0 0.0
    %136 = vmatpush1.msra.mxu0 %v117
    %137 = vmatprep.subr.mxu0 0.0
    %138 = vmatpush1.msra.mxu0 %v118
    %139 = vmatprep.subr.mxu0 0.0
    %140 = vmatpush1.msra.mxu0 %v119
    %141 = vmatprep.subr.mxu0 0.0
    %142 = vmatpush1.msra.mxu0 0.0
    %143 = vmatprep.subr.mxu0 0.0
    %144 = vmatpush1.msra.mxu0 0.0
    %145 = vmatprep.subr.mxu0 0.0
    %146 = vmatpush1.msra.mxu0 0.0
    %147 = vmatprep.subr.mxu0 0.0
    %148 = vmatpush1.msra.mxu0 0.0
    %149 = vmatprep.subr.mxu0 0.0
    %150 = vmatpush1.msra.mxu0 0.0
    %151 = vmatprep.subr.mxu0 0.0
    %152 = vmatpush1.msra.mxu0 0.0
    %153 = vmatprep.subr.mxu0 0.0
    %154 = vmatpush1.msra.mxu0 0.0
    %155 = vmatprep.subr.mxu0 0.0
    %156 = vmatpush1.msra.mxu0 0.0
    %157 = vmatprep.subr.mxu0 0.0
    %158 = vmatpush1.msra.mxu0 0.0
    %159 = vmatprep.subr.mxu0 0.0
    %160 = vmatpush1.msra.mxu0 0.0
    %161 = vmatprep.subr.mxu0 0.0
    %162 = vmatpush1.msra.mxu0 0.0
    %163 = vmatprep.subr.mxu0 0.0
    %164 = vmatpush1.msra.mxu0 0.0
    %165 = vmatprep.subr.mxu0 0.0
    %166 = vmatpush1.msra.mxu0 0.0
    %167 = vmatprep.subr.mxu0 0.0
    %168 = vmatpush1.msra.mxu0 0.0
    %169 = vmatprep.subr.mxu0 0.0
    %170 = vmatpush1.msra.mxu0 0.0
    %171 = vmatprep.subr.mxu0 0.0
    %172 = vmatpush1.msra.mxu0 0.0
    %173 = vmatprep.subr.mxu0 0.0
    %174 = vmatpush1.msra.mxu0 0.0
    %175 = vmatprep.subr.mxu0 0.0
    %176 = vmatpush1.msra.mxu0 0.0
    %177 = vmatprep.subr.mxu0 0.0
    %178 = vmatpush1.msra.mxu0 0.0
    %179 = vmatprep.subr.mxu0 0.0
    %180 = vmatpush1.msra.mxu0 0.0
    %181 = vmatprep.subr.mxu0 0.0
    %182 = vmatpush1.msra.mxu0 0.0
    %183 = vmatprep.subr.mxu0 0.0
    %184 = vmatpush1.msra.mxu0 0.0
    %185 = vmatprep.subr.mxu0 0.0
    %186 = vmatpush1.msra.mxu0 0.0
    %187 = vmatprep.subr.mxu0 0.0
    %188 = vmatpush1.msra.mxu0 0.0
    %189 = vmatprep.subr.mxu0 0.0
    %190 = vmatpush1.msra.mxu0 0.0
    %191 = vmatprep.subr.mxu0 0.0
    %192 = vmatpush1.msra.mxu0 0.0
    %193 = vmatprep.subr.mxu0 0.0
    %194 = vmatpush1.msra.mxu0 0.0
    %195 = vmatprep.subr.mxu0 0.0
    %196 = vmatpush1.msra.mxu0 0.0
    %197 = vmatprep.mubr.f32.mxu0 0.0
    %198 = vmatmul.mubr.f32.gmra.mrb[0].mxu0 %v128
    %v199 = vpop.f32.mrb[0].mxu0
    %v200 = vadd.f32 %v125, %v199
    %v201 = vpop.f32.mrb[0].mxu0
    %202 = vmatprep.mubr.f32.mxu0 0.0
    %203 = vmatmul.mubr.f32.gmra.mrb[0].mxu0 %v131
    %v204 = vpop.f32.mrb[0].mxu0
    %v205 = vadd.f32 %v125, %v204
    %v206 = vpop.f32.mrb[0].mxu0
    %207 = vdwg.mxu0
    %210 = vrot.lane.b32.xlu0 %v200, 120
    %v211 = vpop.permute.xlu0 %210
    %212 = vrot.lane.b32.xlu0 %v205, 120
    %v213 = vpop.permute.xlu0 %212
    %214 = vrot.lane.b32.xlu0 %v200, 112
    %v215 = vpop.permute.xlu0 %214
    %216 = vrot.lane.b32.xlu0 %v205, 112
    %v217 = vpop.permute.xlu0 %216
    %218 = vrot.lane.b32.xlu0 %v200, 104
    %v219 = vpop.permute.xlu0 %218
    %220 = vrot.lane.b32.xlu0 %v205, 104
    %v221 = vpop.permute.xlu0 %220
    %222 = vrot.lane.b32.xlu0 %v200, 96
    %v223 = vpop.permute.xlu0 %222
    %224 = vrot.lane.b32.xlu0 %v205, 96
    %v225 = vpop.permute.xlu0 %224
    %226 = vrot.lane.b32.xlu0 %v211, 96
    %v227 = vpop.permute.xlu0 %226
    %228 = vrot.lane.b32.xlu0 %v213, 96
    %v229 = vpop.permute.xlu0 %228
    %230 = vrot.lane.b32.xlu0 %v215, 96
    %v231 = vpop.permute.xlu0 %230
    %232 = vrot.lane.b32.xlu0 %v217, 96
    %v233 = vpop.permute.xlu0 %232
    %234 = vrot.lane.b32.xlu0 %v219, 96
    %v235 = vpop.permute.xlu0 %234
    %236 = vrot.lane.b32.xlu0 %v221, 96
    %v237 = vpop.permute.xlu0 %236
    %vm238 = vcmask 64512
    %v239 = vsel %vm238, %v200, 0
    %v241 = vsel %vm238, %v205, 0
    %v243 = vsel %vm238, %v211, 0
    %v245 = vsel %vm238, %v213, 0
    %v247 = vsel %vm238, %v215, 0
    %v249 = vsel %vm238, %v217, 0
    %v251 = vsel %vm238, %v219, 0
    %v253 = vsel %vm238, %v221, 0
    %v255 = vsel %vm238, %v223, 0
    %v257 = vsel %vm238, %v225, 0
    %v259 = vsel %vm238, %v227, 0
    %v261 = vsel %vm238, %v229, 0
    %v263 = vsel %vm238, %v231, 0
    %v265 = vsel %vm238, %v233, 0
    %v267 = vsel %vm238, %v235, 0
    %v269 = vsel %vm238, %v237, 0
    %271 = vmatprep.subr.mxu0 0.0
    %272 = vmatpush1.xpose.msra.mxu0 %v255
    %273 = vmatprep.subr.mxu0 0.0
    %274 = vmatpush1.xpose.msra.mxu0 %v257
    %275 = vmatprep.subr.mxu0 0.0
    %276 = vmatpush1.xpose.msra.mxu0 %v259
    %277 = vmatprep.subr.mxu0 0.0
    %278 = vmatpush1.xpose.msra.mxu0 %v261
    %279 = vmatprep.subr.mxu0 0.0
    %280 = vmatpush1.xpose.msra.mxu0 %v263
    %281 = vmatprep.subr.mxu0 0.0
    %282 = vmatpush1.xpose.msra.mxu0 %v265
    %283 = vmatprep.subr.mxu0 0.0
    %284 = vmatpush1.xpose.msra.mxu0 %v267
    %285 = vmatprep.subr.mxu0 0.0
    %286 = vmatpush1.xpose.msra.mxu0 %v269
    %287 = vmatprep.subr.mxu0 0.0
    %288 = vmatpush1.xpose.msra.mxu0 0.0
    %289 = vmatprep.subr.mxu0 0.0
    %290 = vmatpush1.xpose.msra.mxu0 0.0
    %291 = vmatprep.subr.mxu0 0.0
    %292 = vmatpush1.xpose.msra.mxu0 0.0
    %293 = vmatprep.subr.mxu0 0.0
    %294 = vmatpush1.xpose.msra.mxu0 0.0
    %295 = vmatprep.subr.mxu0 0.0
    %296 = vmatpush1.xpose.msra.mxu0 0.0
    %297 = vmatprep.subr.mxu0 0.0
    %298 = vmatpush1.xpose.msra.mxu0 0.0
    %299 = vmatprep.subr.mxu0 0.0
    %300 = vmatpush1.xpose.msra.mxu0 0.0
    %301 = vmatprep.subr.mxu0 0.0
    %302 = vmatpush1.xpose.msra.mxu0 0.0
    %303 = vmatprep.subr.mxu0 0.0
    %304 = vmatpush1.xpose.msra.mxu0 0.0
    %305 = vmatprep.subr.mxu0 0.0
    %306 = vmatpush1.xpose.msra.mxu0 0.0
    %307 = vmatprep.subr.mxu0 0.0
    %308 = vmatpush1.xpose.msra.mxu0 0.0
    %309 = vmatprep.subr.mxu0 0.0
    %310 = vmatpush1.xpose.msra.mxu0 0.0
    %311 = vmatprep.subr.mxu0 0.0
    %312 = vmatpush1.xpose.msra.mxu0 0.0
    %313 = vmatprep.subr.mxu0 0.0
    %314 = vmatpush1.xpose.msra.mxu0 0.0
    %315 = vmatprep.subr.mxu0 0.0
    %316 = vmatpush1.xpose.msra.mxu0 0.0
    %317 = vmatprep.subr.mxu0 0.0
    %318 = vmatpush1.xpose.msra.mxu0 0.0
    %319 = vmatprep.subr.mxu0 0.0
    %320 = vmatpush1.xpose.msra.mxu0 0.0
    %321 = vmatprep.subr.mxu0 0.0
    %322 = vmatpush1.xpose.msra.mxu0 0.0
    %323 = vmatprep.subr.mxu0 0.0
    %324 = vmatpush1.xpose.msra.mxu0 0.0
    %325 = vmatprep.subr.mxu0 0.0
    %326 = vmatpush1.xpose.msra.mxu0 0.0
    %327 = vmatprep.subr.mxu0 0.0
    %328 = vmatpush1.xpose.msra.mxu0 0.0
    %329 = vmatprep.subr.mxu0 0.0
    %330 = vmatpush1.xpose.msra.mxu0 0.0
    %331 = vmatprep.subr.mxu0 0.0
    %332 = vmatpush1.xpose.msra.mxu0 0.0
    %333 = vmatprep.subr.mxu0 0.0
    %334 = vmatpush1.xpose.msra.mxu0 0.0
    %335 = vmatprep.mubr.f32.mxu0 0.0
    %336 = vmatmul.mubr.f32.gmra.mrb[0].mxu0 %v239
    %v337 = vpop.f32.mrb[0].mxu0
    %v338 = vadd.f32 0.0, %v337
    %v339 = vpop.f32.mrb[0].mxu0
    %340 = vmatprep.mubr.f32.mxu0 0.0
    %341 = vmatmul.mubr.f32.gmra.mrb[0].mxu0 %v241
    %v342 = vpop.f32.mrb[0].mxu0
    %v343 = vadd.f32 0.0, %v342
    %v344 = vpop.f32.mrb[0].mxu0
    %345 = vmatprep.mubr.f32.mxu0 0.0
    %346 = vmatmul.mubr.f32.gmra.mrb[0].mxu0 %v243
    %v347 = vpop.f32.mrb[0].mxu0
    %v348 = vadd.f32 0.0, %v347
    %v349 = vpop.f32.mrb[0].mxu0
    %350 = vmatprep.mubr.f32.mxu0 0.0
    %351 = vmatmul.mubr.f32.gmra.mrb[0].mxu0 %v245
    %v352 = vpop.f32.mrb[0].mxu0
    %v353 = vadd.f32 0.0, %v352
    %v354 = vpop.f32.mrb[0].mxu0
    %355 = vmatprep.mubr.f32.mxu0 0.0
    %356 = vmatmul.mubr.f32.gmra.mrb[0].mxu0 %v247
    %v357 = vpop.f32.mrb[0].mxu0
    %v358 = vadd.f32 0.0, %v357
    %v359 = vpop.f32.mrb[0].mxu0
    %360 = vmatprep.mubr.f32.mxu0 0.0
    %361 = vmatmul.mubr.f32.gmra.mrb[0].mxu0 %v249
    %v362 = vpop.f32.mrb[0].mxu0
    %v363 = vadd.f32 0.0, %v362
    %v364 = vpop.f32.mrb[0].mxu0
    %365 = vmatprep.mubr.f32.mxu0 0.0
    %366 = vmatmul.mubr.f32.gmra.mrb[0].mxu0 %v251
    %v367 = vpop.f32.mrb[0].mxu0
    %v368 = vadd.f32 0.0, %v367
    %v369 = vpop.f32.mrb[0].mxu0
    %370 = vmatprep.mubr.f32.mxu0 0.0
    %371 = vmatmul.mubr.f32.gmra.mrb[0].mxu0 %v253
    %v372 = vpop.f32.mrb[0].mxu0
    %v373 = vadd.f32 0.0, %v372
    %v374 = vpop.f32.mrb[0].mxu0
    %375 = vdwg.mxu0
    %v376 = vlaneseq
    %v377 = vshrl.u32 %v376, 7
    %v378 = vadd.s32 %v377, 8
    %v379 = vadd.s32 %v377, 16
    %v380 = vadd.s32 %v377, 24
    %v381 = vadd.s32 %v377, 32
    %v382 = vadd.s32 %v377, 40
    %v383 = vadd.s32 %v377, 48
    %v384 = vadd.s32 %v377, 56
    %vm385 = vcmp.lt.s32.totalorder %v377, 0
    %v386 = vsub.s32 0, %v377
    %v387 = vsel %vm385, %v386, %v377
    %v388 = vshrl.u32 %v387, 1
    %v389 = vand.u32 %v387, 1
    %v390 = vsub.s32 0, %v389
    %v391 = vsel %vm385, %v390, %v389
    %vm392 = vcmp.lt.s32.totalorder %v378, 0
    %v393 = vsub.s32 0, %v378
    %v394 = vsel %vm392, %v393, %v378
    %v395 = vshrl.u32 %v394, 1
    %v396 = vand.u32 %v394, 1
    %v397 = vsub.s32 0, %v396
    %v398 = vsel %vm392, %v397, %v396
    %vm399 = vcmp.lt.s32.totalorder %v379, 0
    %v400 = vsub.s32 0, %v379
    %v401 = vsel %vm399, %v400, %v379
    %v402 = vshrl.u32 %v401, 1
    %v403 = vand.u32 %v401, 1
    %v404 = vsub.s32 0, %v403
    %v405 = vsel %vm399, %v404, %v403
    %vm406 = vcmp.lt.s32.totalorder %v380, 0
    %v407 = vsub.s32 0, %v380
    %v408 = vsel %vm406, %v407, %v380
    %v409 = vshrl.u32 %v408, 1
    %v410 = vand.u32 %v408, 1
    %v411 = vsub.s32 0, %v410
    %v412 = vsel %vm406, %v411, %v410
    %vm413 = vcmp.lt.s32.totalorder %v381, 0
    %v414 = vsub.s32 0, %v381
    %v415 = vsel %vm413, %v414, %v381
    %v416 = vshrl.u32 %v415, 1
    %v417 = vand.u32 %v415, 1
    %v418 = vsub.s32 0, %v417
    %v419 = vsel %vm413, %v418, %v417
    %vm420 = vcmp.lt.s32.totalorder %v382, 0
    %v421 = vsub.s32 0, %v382
    %v422 = vsel %vm420, %v421, %v382
    %v423 = vshrl.u32 %v422, 1
    %v424 = vand.u32 %v422, 1
    %v425 = vsub.s32 0, %v424
    %v426 = vsel %vm420, %v425, %v424
    %vm427 = vcmp.lt.s32.totalorder %v383, 0
    %v428 = vsub.s32 0, %v383
    %v429 = vsel %vm427, %v428, %v383
    %v430 = vshrl.u32 %v429, 1
    %v431 = vand.u32 %v429, 1
    %v432 = vsub.s32 0, %v431
    %v433 = vsel %vm427, %v432, %v431
    %vm434 = vcmp.lt.s32.totalorder %v384, 0
    %v435 = vsub.s32 0, %v384
    %v436 = vsel %vm434, %v435, %v384
    %v437 = vshrl.u32 %v436, 1
    %v438 = vand.u32 %v436, 1
    %v439 = vsub.s32 0, %v438
    %v440 = vsel %vm434, %v439, %v438
    %vm441 = vcmp.ne.s32.totalorder %v391, 0
    %vm442 = vcmp.ne.s32.totalorder %v398, 0
    %vm443 = vcmp.ne.s32.totalorder %v405, 0
    %vm444 = vcmp.ne.s32.totalorder %v412, 0
    %vm445 = vcmp.ne.s32.totalorder %v419, 0
    %vm446 = vcmp.ne.s32.totalorder %v426, 0
    %vm447 = vcmp.ne.s32.totalorder %v433, 0
    %vm448 = vcmp.ne.s32.totalorder %v440, 0
    %vm449 = vcmp.lt.s32.totalorder %v391, 0
    %vm450 = vcmp.lt.s32.totalorder %v398, 0
    %vm451 = vcmp.lt.s32.totalorder %v405, 0
    %vm452 = vcmp.lt.s32.totalorder %v412, 0
    %vm453 = vcmp.lt.s32.totalorder %v419, 0
    %vm454 = vcmp.lt.s32.totalorder %v426, 0
    %vm455 = vcmp.lt.s32.totalorder %v433, 0
    %vm456 = vcmp.lt.s32.totalorder %v440, 0
    %vm457 = vmand %vm449, %vm441
    %vm458 = vmand %vm450, %vm442
    %vm459 = vmand %vm451, %vm443
    %vm460 = vmand %vm452, %vm444
    %vm461 = vmand %vm453, %vm445
    %vm462 = vmand %vm454, %vm446
    %vm463 = vmand %vm455, %vm447
    %vm464 = vmand %vm456, %vm448
    %v465 = vadd.s32 %v391, 2
    %v466 = vadd.s32 %v398, 2
    %v467 = vadd.s32 %v405, 2
    %v468 = vadd.s32 %v412, 2
    %v469 = vadd.s32 %v419, 2
    %v470 = vadd.s32 %v426, 2
    %v471 = vadd.s32 %v433, 2
    %v472 = vadd.s32 %v440, 2
    %v473 = vsel %vm457, %v465, %v391
    %v474 = vsel %vm458, %v466, %v398
    %v475 = vsel %vm459, %v467, %v405
    %v476 = vsel %vm460, %v468, %v412
    %v477 = vsel %vm461, %v469, %v419
    %v478 = vsel %vm462, %v470, %v426
    %v479 = vsel %vm463, %v471, %v433
    %v480 = vsel %vm464, %v472, %v440
    %v481 = vlaneseq
    %v482 = vand.u32 %v481, 127
    %vm483 = vcmp.lt.s32.totalorder %v482, 0
    %v484 = vsub.s32 0, %v482
    %v485 = vsel %vm483, %v484, %v482
    %v486 = vshrl.u32 %v485, 1
    %v487 = vand.u32 %v485, 1
    %v488 = vsub.s32 0, %v487
    %v489 = vsel %vm483, %v488, %v487
    %vm490 = vcmp.ne.s32.totalorder %v489, 0
    %vm491 = vcmp.lt.s32.totalorder %v489, 0
    %vm492 = vmand %vm491, %vm490
    %v493 = vadd.s32 %v489, 2
    %v494 = vsel %vm492, %v493, %v489
    %vm495 = vcmp.eq.s32.totalorder %v473, %v494
    %vm496 = vcmp.eq.s32.totalorder %v474, %v494
    %vm497 = vcmp.eq.s32.totalorder %v475, %v494
    %vm498 = vcmp.eq.s32.totalorder %v476, %v494
    %vm499 = vcmp.eq.s32.totalorder %v477, %v494
    %vm500 = vcmp.eq.s32.totalorder %v478, %v494
    %vm501 = vcmp.eq.s32.totalorder %v479, %v494
    %vm502 = vcmp.eq.s32.totalorder %v480, %v494
    %v503 = vsel %vm495, %v338, -1e+30
    %v504 = vsel %vm496, %v343, -1e+30
    %v505 = vsel %vm497, %v348, -1e+30
    %v506 = vsel %vm498, %v353, -1e+30
    %v507 = vsel %vm499, %v358, -1e+30
    %v508 = vsel %vm500, %v363, -1e+30
    %v509 = vsel %vm501, %v368, -1e+30
    %v510 = vsel %vm502, %v373, -1e+30
    %vm511 = vcmask 523264
    %v512 = vsel %vm511, %v503, -inf
    %513 = vmax.xlane.f32.xlu0 %v512
    %v514 = vpop.xlane.xlu0 %513
    %v515 = vsel %vm511, %v504, -inf
    %516 = vmax.xlane.f32.xlu0 %v515
    %v517 = vpop.xlane.xlu0 %516
    %v518 = vsel %vm511, %v505, -inf
    %519 = vmax.xlane.f32.xlu0 %v518
    %v520 = vpop.xlane.xlu0 %519
    %v521 = vsel %vm511, %v506, -inf
    %522 = vmax.xlane.f32.xlu0 %v521
    %v523 = vpop.xlane.xlu0 %522
    %v524 = vsel %vm511, %v507, -inf
    %525 = vmax.xlane.f32.xlu0 %v524
    %v526 = vpop.xlane.xlu0 %525
    %v527 = vsel %vm511, %v508, -inf
    %528 = vmax.xlane.f32.xlu0 %v527
    %v529 = vpop.xlane.xlu0 %528
    %v530 = vsel %vm511, %v509, -inf
    %531 = vmax.xlane.f32.xlu0 %v530
    %v532 = vpop.xlane.xlu0 %531
    %v533 = vsel %vm511, %v510, -inf
    %534 = vmax.xlane.f32.xlu0 %v533
    %v535 = vpop.xlane.xlu0 %534
    %v536 = vsub.f32 %v503, %v514
    %v537 = vsub.f32 %v504, %v517
    %v538 = vsub.f32 %v505, %v520
    %v539 = vsub.f32 %v506, %v523
    %v540 = vsub.f32 %v507, %v526
    %v541 = vsub.f32 %v508, %v529
    %v542 = vsub.f32 %v509, %v532
    %v543 = vsub.f32 %v510, %v535
    %v544 = vmul.f32 %v536, 1.442695
    %v545 = vpow.pop %v544
    %v546 = vmul.f32 %v537, 1.442695
    %v547 = vpow.pop %v546
    %v548 = vmul.f32 %v538, 1.442695
    %v549 = vpow.pop %v548
    %v550 = vmul.f32 %v539, 1.442695
    %v551 = vpow.pop %v550
    %v552 = vmul.f32 %v540, 1.442695
    %v553 = vpow.pop %v552
    %v554 = vmul.f32 %v541, 1.442695
    %v555 = vpow.pop %v554
    %v556 = vmul.f32 %v542, 1.442695
    %v557 = vpow.pop %v556
    %v558 = vmul.f32 %v543, 1.442695
    %v559 = vpow.pop %v558
    %v560 = vsel %vm511, %v545, 0.0
    %561 = vadd.xlane.f32.xlu0 %v560
    %v562 = vpop.xlane.xlu0 %561
    %v563 = vsel %vm511, %v547, 0.0
    %564 = vadd.xlane.f32.xlu0 %v563
    %v565 = vpop.xlane.xlu0 %564
    %v566 = vsel %vm511, %v549, 0.0
    %567 = vadd.xlane.f32.xlu0 %v566
    %v568 = vpop.xlane.xlu0 %567
    %v569 = vsel %vm511, %v551, 0.0
    %570 = vadd.xlane.f32.xlu0 %v569
    %v571 = vpop.xlane.xlu0 %570
    %v572 = vsel %vm511, %v553, 0.0
    %573 = vadd.xlane.f32.xlu0 %v572
    %v574 = vpop.xlane.xlu0 %573
    %v575 = vsel %vm511, %v555, 0.0
    %576 = vadd.xlane.f32.xlu0 %v575
    %v577 = vpop.xlane.xlu0 %576
    %v578 = vsel %vm511, %v557, 0.0
    %579 = vadd.xlane.f32.xlu0 %v578
    %v580 = vpop.xlane.xlu0 %579
    %v581 = vsel %vm511, %v559, 0.0
    %582 = vadd.xlane.f32.xlu0 %v581
    %v583 = vpop.xlane.xlu0 %582
    %584 = vrot.lane.b32.xlu0 %v200, 64
    %v585 = vpop.permute.xlu0 %584
    %586 = vrot.lane.b32.xlu0 %v205, 64
    %v587 = vpop.permute.xlu0 %586
    %588 = vrot.lane.b32.xlu0 %v211, 64
    %v589 = vpop.permute.xlu0 %588
    %590 = vrot.lane.b32.xlu0 %v213, 64
    %v591 = vpop.permute.xlu0 %590
    %592 = vrot.lane.b32.xlu0 %v215, 64
    %v593 = vpop.permute.xlu0 %592
    %594 = vrot.lane.b32.xlu0 %v217, 64
    %v595 = vpop.permute.xlu0 %594
    %596 = vrot.lane.b32.xlu0 %v219, 64
    %v597 = vpop.permute.xlu0 %596
    %598 = vrot.lane.b32.xlu0 %v221, 64
    %v599 = vpop.permute.xlu0 %598
    %v609 = vsel %vm511, %v545, 0
    %v612 = vsel %vm511, %v547, 0
    %v615 = vsel %vm511, %v549, 0
    %v618 = vsel %vm511, %v551, 0
    %v621 = vsel %vm511, %v553, 0
    %v624 = vsel %vm511, %v555, 0
    %v627 = vsel %vm511, %v557, 0
    %v630 = vsel %vm511, %v559, 0
    %632 = vmatprep.subr.mxu0 0.0
    %633 = vmatpush1.msra.mxu0 %v585
    %634 = vmatprep.subr.mxu0 0.0
    %635 = vmatpush1.msra.mxu0 %v587
    %636 = vmatprep.subr.mxu0 0.0
    %637 = vmatpush1.msra.mxu0 %v589
    %638 = vmatprep.subr.mxu0 0.0
    %639 = vmatpush1.msra.mxu0 %v591
    %640 = vmatprep.subr.mxu0 0.0
    %641 = vmatpush1.msra.mxu0 %v593
    %642 = vmatprep.subr.mxu0 0.0
    %643 = vmatpush1.msra.mxu0 %v595
    %644 = vmatprep.subr.mxu0 0.0
    %645 = vmatpush1.msra.mxu0 %v597
    %646 = vmatprep.subr.mxu0 0.0
    %647 = vmatpush1.msra.mxu0 %v599
    %648 = vmatprep.subr.mxu0 0.0
    %649 = vmatpush1.msra.mxu0 0.0
    %650 = vmatprep.subr.mxu0 0.0
    %651 = vmatpush1.msra.mxu0 0.0
    %652 = vmatprep.subr.mxu0 0.0
    %653 = vmatpush1.msra.mxu0 0.0
    %654 = vmatprep.subr.mxu0 0.0
    %655 = vmatpush1.msra.mxu0 0.0
    %656 = vmatprep.subr.mxu0 0.0
    %657 = vmatpush1.msra.mxu0 0.0
    %658 = vmatprep.subr.mxu0 0.0
    %659 = vmatpush1.msra.mxu0 0.0
    %660 = vmatprep.subr.mxu0 0.0
    %661 = vmatpush1.msra.mxu0 0.0
    %662 = vmatprep.subr.mxu0 0.0
    %663 = vmatpush1.msra.mxu0 0.0
    %664 = vmatprep.subr.mxu0 0.0
    %665 = vmatpush1.msra.mxu0 0.0
    %666 = vmatprep.subr.mxu0 0.0
    %667 = vmatpush1.msra.mxu0 0.0
    %668 = vmatprep.subr.mxu0 0.0
    %669 = vmatpush1.msra.mxu0 0.0
    %670 = vmatprep.subr.mxu0 0.0
    %671 = vmatpush1.msra.mxu0 0.0
    %672 = vmatprep.subr.mxu0 0.0
    %673 = vmatpush1.msra.mxu0 0.0
    %674 = vmatprep.subr.mxu0 0.0
    %675 = vmatpush1.msra.mxu0 0.0
    %676 = vmatprep.subr.mxu0 0.0
    %677 = vmatpush1.msra.mxu0 0.0
    %678 = vmatprep.subr.mxu0 0.0
    %679 = vmatpush1.msra.mxu0 0.0
    %680 = vmatprep.subr.mxu0 0.0
    %681 = vmatpush1.msra.mxu0 0.0
    %682 = vmatprep.subr.mxu0 0.0
    %683 = vmatpush1.msra.mxu0 0.0
    %684 = vmatprep.subr.mxu0 0.0
    %685 = vmatpush1.msra.mxu0 0.0
    %686 = vmatprep.subr.mxu0 0.0
    %687 = vmatpush1.msra.mxu0 0.0
    %688 = vmatprep.subr.mxu0 0.0
    %689 = vmatpush1.msra.mxu0 0.0
    %690 = vmatprep.subr.mxu0 0.0
    %691 = vmatpush1.msra.mxu0 0.0
    %692 = vmatprep.subr.mxu0 0.0
    %693 = vmatpush1.msra.mxu0 0.0
    %694 = vmatprep.subr.mxu0 0.0
    %695 = vmatpush1.msra.mxu0 0.0
    %696 = vmatprep.mubr.f32.mxu0 0.0
    %697 = vmatmul.mubr.f32.gmra.mrb[0].mxu0 %v609
    %v698 = vpop.f32.mrb[0].mxu0
    %v699 = vadd.f32 0.0, %v698
    %v700 = vpop.f32.mrb[0].mxu0
    %701 = vmatprep.mubr.f32.mxu0 0.0
    %702 = vmatmul.mubr.f32.gmra.mrb[0].mxu0 %v612
    %v703 = vpop.f32.mrb[0].mxu0
    %v704 = vadd.f32 0.0, %v703
    %v705 = vpop.f32.mrb[0].mxu0
    %706 = vmatprep.mubr.f32.mxu0 0.0
    %707 = vmatmul.mubr.f32.gmra.mrb[0].mxu0 %v615
    %v708 = vpop.f32.mrb[0].mxu0
    %v709 = vadd.f32 0.0, %v708
    %v710 = vpop.f32.mrb[0].mxu0
    %711 = vmatprep.mubr.f32.mxu0 0.0
    %712 = vmatmul.mubr.f32.gmra.mrb[0].mxu0 %v618
    %v713 = vpop.f32.mrb[0].mxu0
    %v714 = vadd.f32 0.0, %v713
    %v715 = vpop.f32.mrb[0].mxu0
    %716 = vmatprep.mubr.f32.mxu0 0.0
    %717 = vmatmul.mubr.f32.gmra.mrb[0].mxu0 %v621
    %v718 = vpop.f32.mrb[0].mxu0
    %v719 = vadd.f32 0.0, %v718
    %v720 = vpop.f32.mrb[0].mxu0
    %721 = vmatprep.mubr.f32.mxu0 0.0
    %722 = vmatmul.mubr.f32.gmra.mrb[0].mxu0 %v624
    %v723 = vpop.f32.mrb[0].mxu0
    %v724 = vadd.f32 0.0, %v723
    %v725 = vpop.f32.mrb[0].mxu0
    %726 = vmatprep.mubr.f32.mxu0 0.0
    %727 = vmatmul.mubr.f32.gmra.mrb[0].mxu0 %v627
    %v728 = vpop.f32.mrb[0].mxu0
    %v729 = vadd.f32 0.0, %v728
    %v730 = vpop.f32.mrb[0].mxu0
    %731 = vmatprep.mubr.f32.mxu0 0.0
    %732 = vmatmul.mubr.f32.gmra.mrb[0].mxu0 %v630
    %v733 = vpop.f32.mrb[0].mxu0
    %v734 = vadd.f32 0.0, %v733
    %v735 = vpop.f32.mrb[0].mxu0
    %736 = vdwg.mxu0
    %v737 = vrcp.pop %v562
    %v738 = vrcp.pop %v565
    %v739 = vrcp.pop %v568
    %v740 = vrcp.pop %v571
    %v741 = vrcp.pop %v574
    %v742 = vrcp.pop %v577
    %v743 = vrcp.pop %v580
    %v744 = vrcp.pop %v583
    %v745 = vmul.f32 %v699, %v737
    %v746 = vmul.f32 %v704, %v738
    %v747 = vmul.f32 %v709, %v739
    %v748 = vmul.f32 %v714, %v740
    %v749 = vmul.f32 %v719, %v741
    %v750 = vmul.f32 %v724, %v742
    %v751 = vmul.f32 %v729, %v743
    %v752 = vmul.f32 %v734, %v744
    %755 = vrot.lane.b32.xlu0 %v747, 8
    %v756 = vpop.permute.xlu0 %755
    %757 = vrot.lane.b32.xlu0 %v748, 8
    %v758 = vpop.permute.xlu0 %757
    %763 = vrot.lane.b32.xlu0 %v749, 16
    %v764 = vpop.permute.xlu0 %763
    %765 = vrot.lane.b32.xlu0 %v750, 16
    %v766 = vpop.permute.xlu0 %765
    %771 = vrot.lane.b32.xlu0 %v751, 24
    %v772 = vpop.permute.xlu0 %771
    %773 = vrot.lane.b32.xlu0 %v752, 24
    %v774 = vpop.permute.xlu0 %773
    %v777 = vsel %vm238, %v745, %v756
    %v778 = vsel %vm238, %v746, %v758
    %vm779 = vcmask 130048
    %v780 = vsel %vm779, %v777, %v764
    %v781 = vsel %vm779, %v778, %v766
    %vm782 = vcmask 195584
    %v783 = vsel %vm782, %v780, %v772
    %v784 = vsel %vm782, %v781, %v774
    %v785 = vld [vmem:[#allocation7] sm:$0xff]
    %v786 = vld [vmem:[#allocation7 + $0x8] sm:$0xff]
    %v787 = vld [vmem:[#allocation7 + $0x10] sm:$0xff]
    %v788 = vld [vmem:[#allocation7 + $0x18] sm:$0xff]
    %v789 = vld [vmem:[%s6] sm:$0x1]
    %v791 = vlaneseq
    %v792 = vshrl.u32 %v791, 7
    %v793 = vsub.s32 0, %v792
    %v794 = vrot.slane %v789, %v793
    %v797 = vsel %vm70, %v783, 0
    %v800 = vsel %vm70, %v784, 0
    %802 = vmatprep.subr.mxu0 0.0
    %803 = vmatpush1.msra.mxu0 %v785
    %804 = vmatprep.subr.mxu0 0.0
    %805 = vmatpush1.msra.mxu0 %v786
    %806 = vmatprep.subr.mxu0 0.0
    %807 = vmatpush1.msra.mxu0 %v787
    %808 = vmatprep.subr.mxu0 0.0
    %809 = vmatpush1.msra.mxu0 %v788
    %810 = vmatprep.subr.mxu0 0.0
    %811 = vmatpush1.msra.mxu0 0.0
    %812 = vmatprep.subr.mxu0 0.0
    %813 = vmatpush1.msra.mxu0 0.0
    %814 = vmatprep.subr.mxu0 0.0
    %815 = vmatpush1.msra.mxu0 0.0
    %816 = vmatprep.subr.mxu0 0.0
    %817 = vmatpush1.msra.mxu0 0.0
    %818 = vmatprep.subr.mxu0 0.0
    %819 = vmatpush1.msra.mxu0 0.0
    %820 = vmatprep.subr.mxu0 0.0
    %821 = vmatpush1.msra.mxu0 0.0
    %822 = vmatprep.subr.mxu0 0.0
    %823 = vmatpush1.msra.mxu0 0.0
    %824 = vmatprep.subr.mxu0 0.0
    %825 = vmatpush1.msra.mxu0 0.0
    %826 = vmatprep.subr.mxu0 0.0
    %827 = vmatpush1.msra.mxu0 0.0
    %828 = vmatprep.subr.mxu0 0.0
    %829 = vmatpush1.msra.mxu0 0.0
    %830 = vmatprep.subr.mxu0 0.0
    %831 = vmatpush1.msra.mxu0 0.0
    %832 = vmatprep.subr.mxu0 0.0
    %833 = vmatpush1.msra.mxu0 0.0
    %834 = vmatprep.subr.mxu0 0.0
    %835 = vmatpush1.msra.mxu0 0.0
    %836 = vmatprep.subr.mxu0 0.0
    %837 = vmatpush1.msra.mxu0 0.0
    %838 = vmatprep.subr.mxu0 0.0
    %839 = vmatpush1.msra.mxu0 0.0
    %840 = vmatprep.subr.mxu0 0.0
    %841 = vmatpush1.msra.mxu0 0.0
    %842 = vmatprep.subr.mxu0 0.0
    %843 = vmatpush1.msra.mxu0 0.0
    %844 = vmatprep.subr.mxu0 0.0
    %845 = vmatpush1.msra.mxu0 0.0
    %846 = vmatprep.subr.mxu0 0.0
    %847 = vmatpush1.msra.mxu0 0.0
    %848 = vmatprep.subr.mxu0 0.0
    %849 = vmatpush1.msra.mxu0 0.0
    %850 = vmatprep.subr.mxu0 0.0
    %851 = vmatpush1.msra.mxu0 0.0
    %852 = vmatprep.subr.mxu0 0.0
    %853 = vmatpush1.msra.mxu0 0.0
    %854 = vmatprep.subr.mxu0 0.0
    %855 = vmatpush1.msra.mxu0 0.0
    %856 = vmatprep.subr.mxu0 0.0
    %857 = vmatpush1.msra.mxu0 0.0
    %858 = vmatprep.subr.mxu0 0.0
    %859 = vmatpush1.msra.mxu0 0.0
    %860 = vmatprep.subr.mxu0 0.0
    %861 = vmatpush1.msra.mxu0 0.0
    %862 = vmatprep.subr.mxu0 0.0
    %863 = vmatpush1.msra.mxu0 0.0
    %864 = vmatprep.subr.mxu0 0.0
    %865 = vmatpush1.msra.mxu0 0.0
    %866 = vmatprep.mubr.f32.mxu0 0.0
    %867 = vmatmul.mubr.f32.gmra.mrb[0].mxu0 %v797
    %v868 = vpop.f32.mrb[0].mxu0
    %v869 = vadd.f32 %v794, %v868
    %v870 = vpop.f32.mrb[0].mxu0
    %871 = vmatprep.mubr.f32.mxu0 0.0
    %872 = vmatmul.mubr.f32.gmra.mrb[0].mxu0 %v800
    %v873 = vpop.f32.mrb[0].mxu0
    %v874 = vadd.f32 %v794, %v873
    %v875 = vpop.f32.mrb[0].mxu0
    %876 = vdwg.mxu0
    %877 = vst.msk [vmem:[#allocation8] sm:$0xff] %vm70, %v869
    %878 = vst.msk [vmem:[#allocation8 + $0x8] sm:$0xff] %vm70, %v874
    // Predicated region
    $region42: #{multihead_attention.1} parent=1 // pred_check
      _
    $region43: #{multihead_attention.1} parent=1 // pred_check_branch
      %880 = sbr.rel (0) target = $region45
    $region44: #{multihead_attention.1} parent=1 // pred_region
      %s882 = ssub.s32 256, 256
      %883 = vsyncadd [#allocation4], %s882
      %s884 = sshll.u32 [#allocation8], 4
      %s885 = int_to_ptr.vmem [resolvable:$true] %s884
      %890 = dma.vmem_to_hbm [thread:$0]  %s885, 256, %s7, [#allocation4], 128, 128, 8
    $region45: #{multihead_attention.1} parent=1 // pred_fallthru
      _
    // Predicated region
    $region46: #{multihead_attention.1} parent=1 // pred_check
      _
    $region47: #{multihead_attention.1} parent=1 // pred_check_branch
      %892 = sbr.rel (0) target = $region49
    $region48: #{multihead_attention.1} parent=1 // pred_region
      %893 = dma.done [#allocation4], 256
    $region49: #{multihead_attention.1} parent=1 // pred_fallthru
      _
    %894 = vsyncpa [#allocation3], 1
    %895 = vsyncpa [#allocation6], 1
    %896 = vsyncpa [#allocation4], 1

</llo_original>
